<compile_context>
chip_gen: v7x
topology: tpu7x:2x2x1
jax: 0.10.0
libtpu: 0.0.40
codegen_flags: <defaults>
</compile_context>

<pallas_src>
import math

import jax
import jax.numpy as jnp
from jax.experimental import pallas as pl
from jax.experimental.pallas import tpu as pltpu

_LANE = 128
# Candidate lane-dense last dims (widest first: unmasked lane-dense stores).
_LANE_WIDTHS = (2048, 1024, 512, 256, 128)
_DEFAULT_BLOCK_BYTES = 8 * 1024 * 1024       # per-block target for the tiled path
_MAX_BLOCK_BYTES = 10 * 1024 * 1024          # hard cap: 4x (dbl-buffered in+out) < limit
_SINGLE_BLOCK_MAX_BYTES = 12 * 1024 * 1024   # whole-array-in-one-block cap (in+out ~24 MiB)
_VMEM_LIMIT_BYTES = 48 * 1024 * 1024         # requested scoped VMEM; < v7x 64 MiB physical


def _relu_kernel(x_ref, o_ref):
    o_ref[...] = jnp.maximum(x_ref[...], 0)


def _cdiv(a: int, b: int) -> int:
    return -(-a // b)


def _round_up(a: int, b: int) -> int:
    return _cdiv(a, b) * b


def _sublane_multiple(dtype) -> int:
    # Native sublane tiling: (8,128) for 4-byte, (16,128) for 2-byte, (32,128) for 1-byte.
    itemsize = jnp.dtype(dtype).itemsize
    return max(8, 32 // max(1, itemsize))


def _cost(numel: int, itemsize: int) -> pl.CostEstimate:
    # Memory-bound: one compare per element, one read + one write of the array.
    return pl.CostEstimate(flops=numel, transcendentals=0,
                           bytes_accessed=2 * numel * itemsize)


def _even_steps_rows(rows: int, row_bytes: int, gran: int, br: int,
                     max_block_bytes: int) -> int:
    """Nudge block rows so the parallel grid has an even number of steps.

    v7x has 2 TensorCores sharing the parallel axis; an odd step count (e.g. 3)
    splits 2-vs-1 and idles one core for a chunk of the work.
    """
    steps = _cdiv(rows, br)
    if steps <= 1 or steps % 2 == 0:
        return br
    # Prefer more steps (smaller blocks, safe); fall back to fewer (bigger blocks).
    for s in (steps + 1, steps - 1):
        if s < 2:
            continue
        cand = _round_up(_cdiv(rows, s), gran)
        if cand < gran or cand * row_bytes > max_block_bytes:
            continue
        if _cdiv(rows, cand) % 2 == 0:
            return cand
    return br


def _relu_whole(x, donate):
    """Whole array as a single full-extent block: no grid, no pipeline overhead.

    Full-array block dims are exempt from the (8,128) divisibility rule, so this
    also handles awkward (non-multiple-of-128) sizes with zero extra HBM passes.
    """
    itemsize = jnp.dtype(x.dtype).itemsize
    return pl.pallas_call(
        _relu_kernel,
        out_shape=jax.ShapeDtypeStruct(x.shape, x.dtype),
        compiler_params=pltpu.CompilerParams(vmem_limit_bytes=_VMEM_LIMIT_BYTES),
        cost_estimate=_cost(x.size, itemsize),
        input_output_aliases={0: 0} if donate else {},
    )(x)


def _relu_2d(x2d, target_block_bytes, single_block_max_bytes, donate):
    """Lane-dense 2D path: rows tiled in multi-MiB blocks, lanes full width."""
    rows, lanes = x2d.shape
    itemsize = jnp.dtype(x2d.dtype).itemsize
    row_bytes = lanes * itemsize
    total_bytes = rows * row_bytes
    sublane = _sublane_multiple(x2d.dtype)

    if total_bytes <= single_block_max_bytes or rows < sublane:
        return _relu_whole(x2d, donate)

    # Multi-MiB blocks; block_rows is a multiple of the sublane requirement.
    br = (target_block_bytes // row_bytes) // sublane * sublane
    br = max(sublane, min(br, (rows // sublane) * sublane))
    br = _even_steps_rows(rows, row_bytes, sublane, br, _MAX_BLOCK_BYTES)
    grid = (_cdiv(rows, br),)

    return pl.pallas_call(
        _relu_kernel,
        out_shape=jax.ShapeDtypeStruct((rows, lanes), x2d.dtype),
        grid=grid,
        in_specs=[pl.BlockSpec((br, lanes), lambda i: (i, 0))],
        out_specs=pl.BlockSpec((br, lanes), lambda i: (i, 0)),
        compiler_params=pltpu.CompilerParams(
            dimension_semantics=("parallel",),
            vmem_limit_bytes=_VMEM_LIMIT_BYTES),
        cost_estimate=_cost(rows * lanes, itemsize),
        input_output_aliases={0: 0} if donate else {},
    )(x2d)


def _can_tile_leading(shape, dtype, max_block_bytes) -> bool:
    if len(shape) < 2 or shape[0] <= 1:
        return False
    itemsize = jnp.dtype(dtype).itemsize
    row_bytes = int(math.prod(shape[1:])) * itemsize
    gran = _sublane_multiple(dtype) if len(shape) == 2 else 1
    return shape[0] >= gran and gran * row_bytes <= max_block_bytes


def _relu_leading_axis(x, target_block_bytes, donate):
    """Tile along the leading axis; trailing dims full-extent (exempt from (8,128)).

    Handles large arrays whose numel is not a multiple of 128 without any
    wrapper-side pad / slice / concat (i.e. no extra HBM passes).
    """
    shape = x.shape
    ndim = len(shape)
    itemsize = jnp.dtype(x.dtype).itemsize
    row_bytes = int(math.prod(shape[1:])) * itemsize
    # If the tiled axis is the second-to-last dim (ndim == 2), blocks along it
    # must honour the sublane multiple; otherwise any granularity is legal.
    gran = _sublane_multiple(x.dtype) if ndim == 2 else 1

    b0 = (max(1, target_block_bytes // row_bytes) // gran) * gran
    b0 = max(gran, min(b0, (shape[0] // gran) * gran))
    b0 = _even_steps_rows(shape[0], row_bytes, gran, b0, _MAX_BLOCK_BYTES)
    grid = (_cdiv(shape[0], b0),)

    block_shape = (b0,) + tuple(shape[1:])
    index_map = lambda i: (i,) + (0,) * (ndim - 1)

    return pl.pallas_call(
        _relu_kernel,
        out_shape=jax.ShapeDtypeStruct(shape, x.dtype),
        grid=grid,
        in_specs=[pl.BlockSpec(block_shape, index_map)],
        out_specs=pl.BlockSpec(block_shape, index_map),
        compiler_params=pltpu.CompilerParams(
            dimension_semantics=("parallel",),
            vmem_limit_bytes=_VMEM_LIMIT_BYTES),
        cost_estimate=_cost(x.size, itemsize),
        input_output_aliases={0: 0} if donate else {},
    )(x)


def qrelu(x: jax.Array, *, target_block_bytes: int = _DEFAULT_BLOCK_BYTES,
          single_block_max_bytes: int = _SINGLE_BLOCK_MAX_BYTES,
          donate: bool = False) -> jax.Array:
    """ReLU forward matching actnn QReLU.forward. Accepts any shape/dtype.

    donate=True aliases the (reshaped) input buffer into the output; if the
    caller still uses `x` afterwards, XLA inserts a defensive copy (correct,
    but it negates the donation benefit).
    """
    orig_shape = x.shape
    n = x.size
    if n == 0:
        return x
    itemsize = jnp.dtype(x.dtype).itemsize
    total_bytes = n * itemsize

    # Clamp caller-supplied sizes so the pipelined footprint (~4x block for the
    # tiled path, ~2x for the single-block path) always fits the requested VMEM
    # limit -- in particular v7x's 64 MiB physical VMEM.
    target_block_bytes = min(target_block_bytes, _MAX_BLOCK_BYTES)
    single_block_max_bytes = min(single_block_max_bytes, _SINGLE_BLOCK_MAX_BYTES)

    # 1) Free (metadata-only) lane-dense 2D factorization: contiguous DMA, wide
    #    unmasked stores, no pad, no slice.
    lane_width = next((w for w in _LANE_WIDTHS if n % w == 0), None)
    if lane_width is not None:
        out2d = _relu_2d(x.reshape(n // lane_width, lane_width),
                         target_block_bytes, single_block_max_bytes, donate)
        return out2d.reshape(orig_shape)

    # 2) Awkward numel (not a multiple of 128) that fits in one whole-array
    #    block: full-extent blocks are exempt from (8,128) -> one HBM pass.
    if total_bytes <= single_block_max_bytes:
        return _relu_whole(x.reshape(1, n), donate).reshape(orig_shape)

    # 3) Large awkward numel: tile along the leading axis of the original shape
    #    with full-extent trailing dims -> still one HBM pass.
    if _can_tile_leading(orig_shape, x.dtype, _MAX_BLOCK_BYTES):
        return _relu_leading_axis(x, target_block_bytes, donate)

    # Last resort (rare: e.g. a huge 1-D array of awkward length): pad once to a
    # lane multiple and slice back. Costs extra HBM passes; acknowledged.
    rows = _cdiv(n, _LANE)
    x2d = jnp.pad(x.reshape(-1), (0, rows * _LANE - n)).reshape(rows, _LANE)
    out2d = _relu_2d(x2d, target_block_bytes, single_block_max_bytes, donate=False)
    return out2d.reshape(-1)[:n].reshape(orig_shape)


# TODO(synk): actnn's 2-bit packed activation + per-group scales saved for the
# custom backward (ext_quantization's quantization path) is not reproduced here;
# the forward output is identical to ReLU, which is what this module returns.
# If backward is ever needed, fuse the quantized save as extra outputs of
# _relu_kernel (the kernel is HBM-bound with idle VPU slots, so it is ~free).


if __name__ == "__main__":
    key = jax.random.PRNGKey(0)
    k1, k2, k3, k4, k5 = jax.random.split(key, 5)

    # Small NCHW conv activation (single whole-array lane-dense block path).
    x_small = jax.random.normal(k1, (2, 4, 16, 16), dtype=jnp.float32)
    y_small = jax.block_until_ready(qrelu(x_small))
    assert y_small.shape == x_small.shape and y_small.dtype == x_small.dtype
    assert bool(jnp.allclose(y_small, jnp.maximum(x_small, 0.0)))

    # Tiled parallel-grid path with an even step count and a ragged boundary
    # block (rows=20 -> block_rows nudged to 16 -> 2 steps, last block partial).
    x_big = jax.random.normal(k2, (5, 8, 32, 32), dtype=jnp.float32)
    y_big = jax.block_until_ready(
        qrelu(x_big, target_block_bytes=32 * 1024, single_block_max_bytes=16 * 1024))
    assert bool(jnp.allclose(y_big, jnp.maximum(x_big, 0.0)))

    # bf16, sublane-of-16 tiled path (2-step even grid at these forced sizes).
    x_bf16 = jax.random.normal(k3, (128, 512), dtype=jnp.bfloat16)
    y_bf16 = jax.block_until_ready(
        qrelu(x_bf16, target_block_bytes=16 * 1024, single_block_max_bytes=8 * 1024))
    assert y_bf16.dtype == jnp.bfloat16
    assert bool(jnp.array_equal(y_bf16, jnp.maximum(x_bf16, jnp.bfloat16(0))))

    # Awkward numel (not a multiple of 128): single full-extent block, no pad/slice.
    x_odd = jax.random.normal(k4, (3, 5, 7, 11), dtype=jnp.float32)
    y_odd = jax.block_until_ready(qrelu(x_odd))
    assert bool(jnp.allclose(y_odd, jnp.maximum(x_odd, 0.0)))

    # Awkward numel forced down the leading-axis tiled path (6-step even grid,
    # trailing dims full-extent), still no pad/slice.
    x_odd_big = jax.random.normal(k5, (6, 5, 7, 11), dtype=jnp.float32)
    y_odd_big = jax.block_until_ready(
        qrelu(x_odd_big, target_block_bytes=2048, single_block_max_bytes=4096))
    assert bool(jnp.allclose(y_odd_big, jnp.maximum(x_odd_big, 0.0)))

    print("KERNEL_OK")
</pallas_src>

<mosaic_0001>
module attributes {stable_mosaic.version = 11 : i64} {
  func.func @_relu_kernel(%arg0: memref<1x2048xf32, #tpu.memory_space<vmem>>, %arg1: memref<1x2048xf32, #tpu.memory_space<vmem>>) attributes {dimension_semantics = [], scalar_prefetch = 0 : i64, scratch_operands = 0 : i64, tpu.core_type = #tpu.core_type<tc>} {
    %c0 = arith.constant 0 : index
    %c0_0 = arith.constant 0 : index
    %0 = vector.load %arg0[%c0, %c0_0] : memref<1x2048xf32, #tpu.memory_space<vmem>>, vector<1x2048xf32>
    %cst = arith.constant 0.000000e+00 : f32
    %1 = vector.broadcast %cst : f32 to vector<1x2048xf32>
    %2 = arith.maximumf %0, %1 : vector<1x2048xf32>
    %c0_1 = arith.constant 0 : index
    %c0_2 = arith.constant 0 : index
    %3 = vector.load %arg1[%c0_1, %c0_2] : memref<1x2048xf32, #tpu.memory_space<vmem>>, vector<1x2048xf32>
    tpu.vector_store %arg1[%c0_1, %c0_2], %2 {strides = array<i32>} : memref<1x2048xf32, #tpu.memory_space<vmem>>, vector<1x2048xf32>,
    return
  }
}

</mosaic_0001>

<llo_original>
// kernel: tpu_custom_call.1
$region0: #{tpu_custom_call.1}
  #allocation0 [shape = 'u32[]', space=smem, size = 0x4, offset = 0x4, fixed_abs, tag = 'smem constant byte address 0x4 - core index']
  #allocation1 [shape = 'u32[144,128]{1,0:T(1,128)}', space=vmem, size = 0x12000, scoped, tag = 'internal scratch']
  %s0 = inlined_call_operand.hbm [shape: f32[1,2048], index: 0, kind: input, shape index: {}]
  %s1 = inlined_call_operand.hbm [shape: f32[1,2048], index: 1, kind: output, shape index: {}]
  %s2 = sld [smem:[#allocation0]]
  $region18: #{tpu_custom_call.1} parent=0
    _
  %s4 = ssub.s32 1, %s2
  %s5 = scalar_select 0, %s4, %s2
  $region1: #{tpu_custom_call.1} parent=0
    #allocation2 [shape = 'u8[8192]{0}', space=vmem, size = 0x2000, scoped, tag = 'input window, operand 0, single buffered']
    #allocation3 [shape = 's32[1]{0}', space=sflag, size = 0x4, scoped, tag = 'scoped memory for tpu_custom_call.1']
    #allocation4 [shape = 's32[1]{0}', space=sflag, size = 0x4, scoped, tag = 'scoped memory for tpu_custom_call.1']
    #allocation5 [shape = 'u8[8192]{0}', space=vmem, size = 0x2000, scoped, tag = 'output window, operand 0, single buffered']
    %6 = vsyncpa [#allocation3], 0
    %7 = vsyncpa [#allocation4], 0
    // Predicated region
    $region2: #{tpu_custom_call.1} parent=1 // pred_check
      _
    $region3: #{tpu_custom_call.1} parent=1 // pred_check_branch
      %9 = sbr.rel (0) target = $region5
    $region4: #{tpu_custom_call.1} parent=1 // pred_region
      %s11 = ssub.s32 256, 256
      %12 = vsyncadd [#allocation3], %s11
      %s14 = sshll.u32 [#allocation2], 4
      %s15 = int_to_ptr.vmem [resolvable:$true] %s14
      %17 = dma.hbm_to_vmem [thread:$0]  %s0, 256, %s15, [#allocation3]
    $region5: #{tpu_custom_call.1} parent=1 // pred_fallthru
      _
    // Predicated region
    $region6: #{tpu_custom_call.1} parent=1 // pred_check
      _
    $region7: #{tpu_custom_call.1} parent=1 // pred_check_branch
      %19 = sbr.rel (0) target = $region9
    $region8: #{tpu_custom_call.1} parent=1 // pred_region
      %20 = dma.done [#allocation3], 256
    $region9: #{tpu_custom_call.1} parent=1 // pred_fallthru
      _
    %v21 = vld [vmem:[#allocation2] sm:$0xff]
    %v22 = vld [vmem:[#allocation2 + $0x8] sm:$0xff]
    %v23 = vmax.f32 %v21, 0.0
    %v24 = vmax.f32 %v22, 0.0
    %25 = vst [vmem:[#allocation5] sm:$0xff] %v23
    %26 = vst [vmem:[#allocation5 + $0x8] sm:$0xff] %v24
    // Predicated region
    $region10: #{tpu_custom_call.1} parent=1 // pred_check
      _
    $region11: #{tpu_custom_call.1} parent=1 // pred_check_branch
      %28 = sbr.rel (0) target = $region13
    $region12: #{tpu_custom_call.1} parent=1 // pred_region
      %s30 = ssub.s32 256, 256
      %31 = vsyncadd [#allocation4], %s30
      %s33 = sshll.u32 [#allocation5], 4
      %s34 = int_to_ptr.vmem [resolvable:$true] %s33
      %36 = dma.vmem_to_hbm [thread:$0]  %s34, 256, %s1, [#allocation4]
    $region13: #{tpu_custom_call.1} parent=1 // pred_fallthru
      _
    // Predicated region
    $region14: #{tpu_custom_call.1} parent=1 // pred_check
      _
    $region15: #{tpu_custom_call.1} parent=1 // pred_check_branch
      %38 = sbr.rel (0) target = $region17
    $region16: #{tpu_custom_call.1} parent=1 // pred_region
      %39 = dma.done [#allocation4], 256
    $region17: #{tpu_custom_call.1} parent=1 // pred_fallthru
      _
    %40 = vsyncpa [#allocation3], 1
    %41 = vsyncpa [#allocation4], 1

</llo_original>
